<compile_context>
chip_gen: v7x
topology: tpu7x:2x2x1
jax: 0.10.0
libtpu: 0.0.40
codegen_flags: <defaults>
</compile_context>

<pallas_src>
import functools

import jax
import jax.numpy as jnp
from jax.experimental import pallas as pl
from jax.experimental.pallas import tpu as pltpu

EPS = 1e-5


def _actor_kernel(consts_ref, x_ref, w1_ref, b1_ref, w2_ref, b2_ref, w3r_ref,
                  out_ref, *, n_valid):
    """One grid step == TB batch elements.

    consts_ref : SMEM f32[2] = [empty_node_logit, b3]
    x_ref      : VMEM f32[TB, N_pad, 16]    (real nodes only; no zero row)
    w1..w3r    : VMEM weights (w3 passed as a (1, 32) row)
    out_ref    : VMEM f32[TB, N_pad + 1]    (lane-dense; column 0 = empty node)
    """
    tb, n_pad, d = x_ref.shape
    rows = tb * n_pad

    # ---- embedding MLP on all TB*N_pad node rows at once (MXU) ----
    x2 = x_ref[...].reshape(rows, d)                                        # (M, 16)
    h1 = jnp.dot(x2, w1_ref[...], preferred_element_type=jnp.float32) + b1_ref[...]
    h1 = jnp.maximum(h1, 0.0)                                               # (M, 64)
    h2 = jnp.dot(h1, w2_ref[...], preferred_element_type=jnp.float32) + b2_ref[...]
    h2 = jnp.maximum(h2, 0.0)                                               # (M, 32)

    # ---- final 32 -> 1 projection as VPU multiply + lane reduce (no MXU) ----
    b3 = consts_ref[1]
    t = h2 * w3r_ref[...]                                                   # (M, 32)
    logits = jnp.sum(t.reshape(tb, n_pad, 32), axis=-1) + b3                # (TB, N_pad)

    # Mask node-padding columns (only present when N is not a multiple of 8).
    if n_pad > n_valid:
        col = jax.lax.broadcasted_iota(jnp.int32, (tb, n_pad), 1)
        logits = jnp.where(col < n_valid, logits, -jnp.inf)

    # ---- softmax over [empty node, real nodes], +eps, renormalize (fused) ----
    e0_logit = consts_ref[0]                                                # scalar
    m_row = jnp.maximum(jnp.max(logits, axis=-1, keepdims=True), e0_logit)  # (TB, 1)
    e_real = jnp.exp(logits - m_row)                                        # (TB, N_pad)
    e_zero = jnp.exp(e0_logit - m_row)                                      # (TB, 1)
    s = jnp.sum(e_real, axis=-1, keepdims=True) + e_zero                    # (TB, 1)

    # softmax(x)+eps renormalized == (e + eps*s) / (s * (1 + eps*(N+1)))
    inv = pl.reciprocal(s * (1.0 + EPS * (n_valid + 1)), approx=False)      # (TB, 1)
    out_ref[:, 0:1] = (e_zero + EPS * s) * inv
    out_ref[:, 1:] = (e_real + EPS * s) * inv


def _choose_batch_tile(batch, n_pad, target_rows=512, max_rows=4096):
    """Batch elements per grid step: aim for >= ~target_rows MLP rows, cap VMEM use."""
    tb = max(1, pl.cdiv(target_rows, n_pad))
    tb = min(tb, max(1, max_rows // n_pad))
    if tb >= batch:
        return batch                     # single (or few) full-batch step(s)
    tb = -(-tb // 8) * 8                 # multiple of 8 for the (TB, N+1) output block
    return min(tb, batch)


def decoupled_episodic_actor_forward(nodes, params, *, target_rows=512, max_rows=4096):
    """nodes: [B, N, 16] float32  ->  prob1: [B, N+1] float32."""
    w1, b1, w2, b2, w3, b3 = params
    B, N, D = nodes.shape
    assert D == 16, "embedding MLP expects feature dim 16"

    nodes = nodes.astype(jnp.float32)

    # Pad node axis to a sublane multiple (no-op when N % 8 == 0); padded columns are
    # masked with -inf inside the kernel before the softmax.
    n_pad = -(-N // 8) * 8
    if n_pad != N:
        nodes = jnp.pad(nodes, ((0, 0), (0, n_pad - N), (0, 0)))

    # Batch tile + batch padding so the grid blocks evenly.
    tb = _choose_batch_tile(B, n_pad, target_rows, max_rows)
    b_pad = -(-B // tb) * tb
    if b_pad != B:
        nodes = jnp.pad(nodes, ((0, b_pad - B), (0, 0), (0, 0)))

    # The "empty node" row is all zeros, so its logit depends only on the params.
    # Computing it here (tiny) lets the kernel skip the torch.cat entirely.
    h1e = jax.nn.relu(b1)
    h2e = jax.nn.relu(h1e @ w2 + b2)
    empty_logit = (h2e @ w3)[0] + b3[0]
    consts = jnp.stack([empty_logit, b3[0]]).astype(jnp.float32)            # SMEM scalars

    b1r = b1.reshape(1, -1).astype(jnp.float32)
    b2r = b2.reshape(1, -1).astype(jnp.float32)
    w3r = w3.reshape(1, -1).astype(jnp.float32)                             # (1, 32) row

    grid = (b_pad // tb,)
    weight_spec = lambda shape: pl.BlockSpec(shape, lambda i: (0, 0))       # VMEM-resident

    out = pl.pallas_call(
        functools.partial(_actor_kernel, n_valid=N),
        out_shape=jax.ShapeDtypeStruct((b_pad, n_pad + 1), jnp.float32),
        grid_spec=pltpu.PrefetchScalarGridSpec(
            num_scalar_prefetch=0,
            grid=grid,
            in_specs=[
                pl.BlockSpec(memory_space=pltpu.MemorySpace.SMEM),          # consts (2,)
                pl.BlockSpec((tb, n_pad, 16), lambda i: (i, 0, 0)),         # nodes block
                weight_spec((16, 64)),                                      # W1
                weight_spec((1, 64)),                                       # b1
                weight_spec((64, 32)),                                      # W2
                weight_spec((1, 32)),                                       # b2
                weight_spec((1, 32)),                                       # w3 row
            ],
            out_specs=pl.BlockSpec((tb, n_pad + 1), lambda i: (i, 0)),
        ),
        compiler_params=pltpu.CompilerParams(
            dimension_semantics=("parallel",),
            vmem_limit_bytes=32 * 1024 * 1024,   # explicit, safe on v5e/v6e/v7x
        ),
    )(consts, nodes, w1.astype(jnp.float32), b1r, w2.astype(jnp.float32), b2r, w3r)

    return out[:B, :N + 1]


def init_params(key):
    """Deterministic init mimicking nn.Linear default (uniform +/- 1/sqrt(fan_in))."""
    def linear(key, fan_in, fan_out):
        kw, kb = jax.random.split(key)
        bound = 1.0 / jnp.sqrt(fan_in)
        w = jax.random.uniform(kw, (fan_in, fan_out), jnp.float32, -bound, bound)
        b = jax.random.uniform(kb, (fan_out,), jnp.float32, -bound, bound)
        return w, b

    k1, k2, k3 = jax.random.split(key, 3)
    w1, b1 = linear(k1, 16, 64)
    w2, b2 = linear(k2, 64, 32)
    w3, b3 = linear(k3, 32, 1)
    return (w1, b1, w2, b2, w3, b3)


def reference_forward(nodes, params):
    w1, b1, w2, b2, w3, b3 = params
    B, N, D = nodes.shape
    x = jnp.concatenate([jnp.zeros((B, 1, D), nodes.dtype), nodes], axis=1)
    h1 = jax.nn.relu(x @ w1 + b1)
    h2 = jax.nn.relu(h1 @ w2 + b2)
    logit = (h2 @ w3 + b3)[..., 0]
    p = jax.nn.softmax(logit, axis=-1) + EPS
    return p / jnp.sum(p, axis=-1, keepdims=True)


if __name__ == "__main__":
    key = jax.random.PRNGKey(0)
    k_params, k_data = jax.random.split(key)
    params = init_params(k_params)

    # Cases: (B, N) small aligned case; N not a multiple of 8 (masked node padding);
    # and a forced multi-step batch-blocked grid (padded batch, grid of 3 steps).
    cases = [
        ((2, 8), {}),
        ((3, 5), {}),
        ((20, 8), dict(target_rows=64)),
    ]
    for idx, ((B, N), kw) in enumerate(cases):
        nodes = jax.random.normal(jax.random.fold_in(k_data, idx), (B, N, 16), jnp.float32)
        prob1 = decoupled_episodic_actor_forward(nodes, params, **kw)
        prob1 = jax.block_until_ready(prob1)
        ref = reference_forward(nodes, params)
        assert prob1.shape == (B, N + 1)
        assert jnp.allclose(prob1, ref, rtol=1e-4, atol=1e-5), f"mismatch vs reference (case {idx})"
        assert jnp.allclose(jnp.sum(prob1, axis=-1), 1.0, atol=1e-5), f"rows do not sum to 1 (case {idx})"

    print("KERNEL_OK")
</pallas_src>

<mosaic_0001>
module attributes {stable_mosaic.version = 11 : i64} {
  func.func @_actor_kernel(%arg0: i32, %arg1: memref<2xf32, #tpu.memory_space<smem>>, %arg2: memref<2x8x16xf32, #tpu.memory_space<vmem>>, %arg3: memref<16x64xf32, #tpu.memory_space<vmem>>, %arg4: memref<1x64xf32, #tpu.memory_space<vmem>>, %arg5: memref<64x32xf32, #tpu.memory_space<vmem>>, %arg6: memref<1x32xf32, #tpu.memory_space<vmem>>, %arg7: memref<1x32xf32, #tpu.memory_space<vmem>>, %arg8: memref<2x9xf32, #tpu.memory_space<vmem>>) attributes {dimension_semantics = [#tpu.dimension_semantics<parallel>], iteration_bounds = array<i64: 1>, scalar_prefetch = 0 : i64, scratch_operands = 0 : i64, tpu.core_type = #tpu.core_type<tc>, window_params = [{transform_indices = @transform_0, window_bounds = array<i64: 2>}, {transform_indices = @transform_1, window_bounds = array<i64: 2, 8, 16>}, {pipeline_mode = #tpu.pipeline_mode<synchronous>, transform_indices = @transform_2, window_bounds = array<i64: 16, 64>}, {pipeline_mode = #tpu.pipeline_mode<synchronous>, transform_indices = @transform_3, window_bounds = array<i64: 1, 64>}, {pipeline_mode = #tpu.pipeline_mode<synchronous>, transform_indices = @transform_4, window_bounds = array<i64: 64, 32>}, {pipeline_mode = #tpu.pipeline_mode<synchronous>, transform_indices = @transform_5, window_bounds = array<i64: 1, 32>}, {pipeline_mode = #tpu.pipeline_mode<synchronous>, transform_indices = @transform_6, window_bounds = array<i64: 1, 32>}, {transform_indices = @transform_7, window_bounds = array<i64: 2, 9>}]} {
    %c0 = arith.constant 0 : index
    %c0_0 = arith.constant 0 : index
    %c0_1 = arith.constant 0 : index
    %0 = vector.load %arg2[%c0, %c0_0, %c0_1] : memref<2x8x16xf32, #tpu.memory_space<vmem>>, vector<2x8x16xf32>
    %1 = vector.shape_cast %0 : vector<2x8x16xf32> to vector<16x16xf32>
    %c0_2 = arith.constant 0 : index
    %c0_3 = arith.constant 0 : index
    %2 = vector.load %arg3[%c0_2, %c0_3] : memref<16x64xf32, #tpu.memory_space<vmem>>, vector<16x64xf32>
    %cst = arith.constant dense<0.000000e+00> : vector<16x64xf32>
    %3 = tpu.matmul %1, %2, %cst {dimension_numbers = #tpu.dot_dimension_numbers<[1], [0], [0], [1], [0, 0, 1, 1], [], []>} : vector<16x16xf32>, vector<16x64xf32>, vector<16x64xf32> -> vector<16x64xf32>
    %c0_4 = arith.constant 0 : index
    %c0_5 = arith.constant 0 : index
    %4 = vector.load %arg4[%c0_4, %c0_5] : memref<1x64xf32, #tpu.memory_space<vmem>>, vector<1x64xf32>
    %5 = vector.broadcast %4 : vector<1x64xf32> to vector<16x64xf32>
    %6 = arith.addf %3, %5 : vector<16x64xf32>
    %cst_6 = arith.constant 0.000000e+00 : f32
    %7 = vector.broadcast %cst_6 : f32 to vector<16x64xf32>
    %8 = arith.maximumf %6, %7 : vector<16x64xf32>
    %c0_7 = arith.constant 0 : index
    %c0_8 = arith.constant 0 : index
    %9 = vector.load %arg5[%c0_7, %c0_8] : memref<64x32xf32, #tpu.memory_space<vmem>>, vector<64x32xf32>
    %cst_9 = arith.constant dense<0.000000e+00> : vector<16x32xf32>
    %10 = tpu.matmul %8, %9, %cst_9 {dimension_numbers = #tpu.dot_dimension_numbers<[1], [0], [0], [1], [0, 0, 1, 1], [], []>} : vector<16x64xf32>, vector<64x32xf32>, vector<16x32xf32> -> vector<16x32xf32>
    %c0_10 = arith.constant 0 : index
    %c0_11 = arith.constant 0 : index
    %11 = vector.load %arg6[%c0_10, %c0_11] : memref<1x32xf32, #tpu.memory_space<vmem>>, vector<1x32xf32>
    %12 = vector.broadcast %11 : vector<1x32xf32> to vector<16x32xf32>
    %13 = arith.addf %10, %12 : vector<16x32xf32>
    %cst_12 = arith.constant 0.000000e+00 : f32
    %14 = vector.broadcast %cst_12 : f32 to vector<16x32xf32>
    %15 = arith.maximumf %13, %14 : vector<16x32xf32>
    %c1 = arith.constant 1 : index
    %16 = memref.load %arg1[%c1] : memref<2xf32, #tpu.memory_space<smem>>
    %c0_13 = arith.constant 0 : index
    %c0_14 = arith.constant 0 : index
    %17 = vector.load %arg7[%c0_13, %c0_14] : memref<1x32xf32, #tpu.memory_space<vmem>>, vector<1x32xf32>
    %18 = vector.broadcast %17 : vector<1x32xf32> to vector<16x32xf32>
    %19 = arith.mulf %15, %18 : vector<16x32xf32>
    %20 = vector.shape_cast %19 : vector<16x32xf32> to vector<2x8x32xf32>
    %cst_15 = arith.constant dense<0.000000e+00> : vector<2x8xf32>
    %21 = vector.multi_reduction <add>, %20, %cst_15 [2] : vector<2x8x32xf32> to vector<2x8xf32>
    %22 = vector.broadcast %16 : f32 to vector<2x8xf32>
    %23 = arith.addf %21, %22 : vector<2x8xf32>
    %c0_16 = arith.constant 0 : index
    %24 = memref.load %arg1[%c0_16] : memref<2xf32, #tpu.memory_space<smem>>
    %cst_17 = arith.constant dense<0xFF800000> : vector<2xf32>
    %25 = vector.multi_reduction <maximumf>, %23, %cst_17 [1] : vector<2x8xf32> to vector<2xf32>
    %26 = vector.shape_cast %25 : vector<2xf32> to vector<2x1xf32>
    %27 = vector.broadcast %24 : f32 to vector<2x1xf32>
    %28 = arith.maximumf %26, %27 : vector<2x1xf32>
    %29 = vector.broadcast %28 : vector<2x1xf32> to vector<2x8xf32>
    %30 = arith.subf %23, %29 : vector<2x8xf32>
    %31 = math.exp %30 : vector<2x8xf32>
    %32 = vector.broadcast %24 : f32 to vector<2x1xf32>
    %33 = arith.subf %32, %28 : vector<2x1xf32>
    %34 = math.exp %33 : vector<2x1xf32>
    %cst_18 = arith.constant dense<0.000000e+00> : vector<2xf32>
    %35 = vector.multi_reduction <add>, %31, %cst_18 [1] : vector<2x8xf32> to vector<2xf32>
    %36 = vector.shape_cast %35 : vector<2xf32> to vector<2x1xf32>
    %37 = arith.addf %36, %34 : vector<2x1xf32>
    %cst_19 = arith.constant 1.000090e+00 : f32
    %38 = vector.broadcast %cst_19 : f32 to vector<2x1xf32>
    %39 = arith.mulf %37, %38 : vector<2x1xf32>
    %40 = tpu.reciprocal %39 : vector<2x1xf32> -> vector<2x1xf32>
    %cst_20 = arith.constant 9.99999974E-6 : f32
    %41 = vector.broadcast %cst_20 : f32 to vector<2x1xf32>
    %42 = arith.mulf %41, %37 : vector<2x1xf32>
    %43 = arith.addf %34, %42 : vector<2x1xf32>
    %44 = arith.mulf %43, %40 : vector<2x1xf32>
    %c0_21 = arith.constant 0 : index
    %c0_22 = arith.constant 0 : index
    %45 = vector.load %arg8[%c0_21, %c0_22] : memref<2x9xf32, #tpu.memory_space<vmem>>, vector<2x1xf32>
    tpu.vector_store %arg8[%c0_21, %c0_22], %44 {strides = array<i32>} : memref<2x9xf32, #tpu.memory_space<vmem>>, vector<2x1xf32>,
    %cst_23 = arith.constant 9.99999974E-6 : f32
    %46 = vector.broadcast %cst_23 : f32 to vector<2x1xf32>
    %47 = arith.mulf %46, %37 : vector<2x1xf32>
    %48 = vector.broadcast %47 : vector<2x1xf32> to vector<2x8xf32>
    %49 = arith.addf %31, %48 : vector<2x8xf32>
    %50 = vector.broadcast %40 : vector<2x1xf32> to vector<2x8xf32>
    %51 = arith.mulf %49, %50 : vector<2x8xf32>
    %c0_24 = arith.constant 0 : index
    %c1_25 = arith.constant 1 : index
    %52 = vector.load %arg8[%c0_24, %c1_25] : memref<2x9xf32, #tpu.memory_space<vmem>>, vector<2x8xf32>
    tpu.vector_store %arg8[%c0_24, %c1_25], %51 {strides = array<i32>} : memref<2x9xf32, #tpu.memory_space<vmem>>, vector<2x8xf32>,
    return
  }
  func.func @transform_0(%arg0: i32) -> i32 {
    %c0_i32 = arith.constant 0 : i32
    %c0_i32_0 = arith.constant 0 : i32
    return %c0_i32 : i32
  }
  func.func @transform_1(%arg0: i32) -> (i32, i32, i32) {
    %c0_i32 = arith.constant 0 : i32
    %c0_i32_0 = arith.constant 0 : i32
    %c0_i32_1 = arith.constant 0 : i32
    return %arg0, %c0_i32, %c0_i32_0 : i32, i32, i32
  }
  func.func @transform_2(%arg0: i32) -> (i32, i32) {
    %c0_i32 = arith.constant 0 : i32
    %c0_i32_0 = arith.constant 0 : i32
    %c0_i32_1 = arith.constant 0 : i32
    return %c0_i32, %c0_i32_0 : i32, i32
  }
  func.func @transform_3(%arg0: i32) -> (i32, i32) {
    %c0_i32 = arith.constant 0 : i32
    %c0_i32_0 = arith.constant 0 : i32
    %c0_i32_1 = arith.constant 0 : i32
    return %c0_i32, %c0_i32_0 : i32, i32
  }
  func.func @transform_4(%arg0: i32) -> (i32, i32) {
    %c0_i32 = arith.constant 0 : i32
    %c0_i32_0 = arith.constant 0 : i32
    %c0_i32_1 = arith.constant 0 : i32
    return %c0_i32, %c0_i32_0 : i32, i32
  }
  func.func @transform_5(%arg0: i32) -> (i32, i32) {
    %c0_i32 = arith.constant 0 : i32
    %c0_i32_0 = arith.constant 0 : i32
    %c0_i32_1 = arith.constant 0 : i32
    return %c0_i32, %c0_i32_0 : i32, i32
  }
  func.func @transform_6(%arg0: i32) -> (i32, i32) {
    %c0_i32 = arith.constant 0 : i32
    %c0_i32_0 = arith.constant 0 : i32
    %c0_i32_1 = arith.constant 0 : i32
    return %c0_i32, %c0_i32_0 : i32, i32
  }
  func.func @transform_7(%arg0: i32) -> (i32, i32) {
    %c0_i32 = arith.constant 0 : i32
    %c0_i32_0 = arith.constant 0 : i32
    return %arg0, %c0_i32 : i32, i32
  }
}

</mosaic_0001>

<llo_original>
// kernel: tpu_custom_call.1
$region0: #{tpu_custom_call.1}
  #allocation0 [shape = 'u32[]', space=smem, size = 0x4, offset = 0x4, fixed_abs, tag = 'smem constant byte address 0x4 - core index']
  #allocation1 [shape = 'u32[144,128]{1,0:T(1,128)}', space=vmem, size = 0x12000, scoped, tag = 'internal scratch']
  %s0 = inlined_call_operand.vmem [shape: f32[2], index: 0, kind: input, shape index: {}]
  %s1 = inlined_call_operand.vmem [shape: f32[2,8,16], index: 1, kind: input, shape index: {}]
  %s2 = inlined_call_operand.vmem [shape: f32[16,64], index: 2, kind: input, shape index: {}]
  %s3 = inlined_call_operand.vmem [shape: f32[1,64], index: 3, kind: input, shape index: {}]
  %s4 = inlined_call_operand.vmem [shape: f32[64,32], index: 4, kind: input, shape index: {}]
  %s5 = inlined_call_operand.vmem [shape: f32[1,32], index: 5, kind: input, shape index: {}]
  %s6 = inlined_call_operand.vmem [shape: f32[1,32], index: 6, kind: input, shape index: {}]
  %s7 = inlined_call_operand.hbm [shape: f32[2,9], index: 7, kind: output, shape index: {}]
  %s8 = sld [smem:[#allocation0]]
  $region42: #{tpu_custom_call.1} parent=0
    _
  %s10 = ssub.s32 1, %s8
  %s11 = scalar_select 0, %s10, %s8
  $region1: #{tpu_custom_call.1} parent=0
    #allocation2 [shape = 'u8[512]{0}', space=smem, size = 0x200, scoped, tag = 'input window, operand 0, single buffered']
    #allocation3 [shape = 's32[1]{0}', space=sflag, size = 0x4, scoped, tag = 'scoped memory for tpu_custom_call.1']
    #allocation4 [shape = 's32[1]{0}', space=sflag, size = 0x4, scoped, tag = 'scoped memory for tpu_custom_call.1']
    #allocation5 [shape = 'u8[1024]{0}', space=vmem, size = 0x400, scoped, tag = 'output window, operand 0, single buffered']
    %12 = vsyncpa [#allocation4], 0
    %13 = vsyncpa [#allocation3], 0
    // Predicated region
    $region2: #{tpu_custom_call.1} parent=1 // pred_check
      _
    $region3: #{tpu_custom_call.1} parent=1 // pred_check_branch
      %15 = sbr.rel (0) target = $region5
    $region4: #{tpu_custom_call.1} parent=1 // pred_region
      %s17 = ssub.s32 16, 16
      %18 = vsyncadd [#allocation4], %s17
      %s20 = sshll.u32 %s0, 4
      %s21 = int_to_ptr.vmem [resolvable:$true] %s20
      %23 = dma.vmem_to_smem %s21, 16, [#allocation2], [#allocation4]
    $region5: #{tpu_custom_call.1} parent=1 // pred_fallthru
      _
    // Predicated region
    $region6: #{tpu_custom_call.1} parent=1 // pred_check
      _
    $region7: #{tpu_custom_call.1} parent=1 // pred_check_branch
      %25 = sbr.rel (0) target = $region9
    $region8: #{tpu_custom_call.1} parent=1 // pred_region
      _
    $region9: #{tpu_custom_call.1} parent=1 // pred_fallthru
      _
    // Predicated region
    $region10: #{tpu_custom_call.1} parent=1 // pred_check
      _
    $region11: #{tpu_custom_call.1} parent=1 // pred_check_branch
      %27 = sbr.rel (0) target = $region13
    $region12: #{tpu_custom_call.1} parent=1 // pred_region
      _
    $region13: #{tpu_custom_call.1} parent=1 // pred_fallthru
      _
    // Predicated region
    $region14: #{tpu_custom_call.1} parent=1 // pred_check
      _
    $region15: #{tpu_custom_call.1} parent=1 // pred_check_branch
      %29 = sbr.rel (0) target = $region17
    $region16: #{tpu_custom_call.1} parent=1 // pred_region
      _
    $region17: #{tpu_custom_call.1} parent=1 // pred_fallthru
      _
    // Predicated region
    $region18: #{tpu_custom_call.1} parent=1 // pred_check
      _
    $region19: #{tpu_custom_call.1} parent=1 // pred_check_branch
      %31 = sbr.rel (0) target = $region21
    $region20: #{tpu_custom_call.1} parent=1 // pred_region
      _
    $region21: #{tpu_custom_call.1} parent=1 // pred_fallthru
      _
    // Predicated region
    $region22: #{tpu_custom_call.1} parent=1 // pred_check
      _
    $region23: #{tpu_custom_call.1} parent=1 // pred_check_branch
      %33 = sbr.rel (0) target = $region25
    $region24: #{tpu_custom_call.1} parent=1 // pred_region
      _
    $region25: #{tpu_custom_call.1} parent=1 // pred_fallthru
      _
    // Predicated region
    $region26: #{tpu_custom_call.1} parent=1 // pred_check
      _
    $region27: #{tpu_custom_call.1} parent=1 // pred_check_branch
      %35 = sbr.rel (0) target = $region29
    $region28: #{tpu_custom_call.1} parent=1 // pred_region
      _
    $region29: #{tpu_custom_call.1} parent=1 // pred_fallthru
      _
    // Predicated region
    $region30: #{tpu_custom_call.1} parent=1 // pred_check
      _
    $region31: #{tpu_custom_call.1} parent=1 // pred_check_branch
      %37 = sbr.rel (0) target = $region33
    $region32: #{tpu_custom_call.1} parent=1 // pred_region
      %38 = dma.done [#allocation4], 16
    $region33: #{tpu_custom_call.1} parent=1 // pred_fallthru
      _
    %39 = sfence
    %v40 = vld [vmem:[%s1] sm:$0xff]
    %v41 = vld [vmem:[%s1 + $0x8] sm:$0xff]
    %v42 = vld [vmem:[%s2] sm:$0xff]
    %v43 = vld [vmem:[%s2 + $0x8] sm:$0xff]
    %v44 = vld [vmem:[%s3] sm:$0x1]
    %v46 = vlaneseq
    %v47 = vshrl.u32 %v46, 7
    %v48 = vsub.s32 0, %v47
    %v49 = vrot.slane %v44, %v48
    %vm51 = vcmask 130048
    %v53 = vsel %vm51, %v40, 0
    %v56 = vsel %vm51, %v41, 0
    %58 = vmatprep.subr.mxu0 0.0
    %59 = vmatpush1.msra.mxu0 %v42
    %60 = vmatprep.subr.mxu0 0.0
    %61 = vmatpush1.msra.mxu0 %v43
    %62 = vmatprep.subr.mxu0 0.0
    %63 = vmatpush1.msra.mxu0 0.0
    %64 = vmatprep.subr.mxu0 0.0
    %65 = vmatpush1.msra.mxu0 0.0
    %66 = vmatprep.subr.mxu0 0.0
    %67 = vmatpush1.msra.mxu0 0.0
    %68 = vmatprep.subr.mxu0 0.0
    %69 = vmatpush1.msra.mxu0 0.0
    %70 = vmatprep.subr.mxu0 0.0
    %71 = vmatpush1.msra.mxu0 0.0
    %72 = vmatprep.subr.mxu0 0.0
    %73 = vmatpush1.msra.mxu0 0.0
    %74 = vmatprep.subr.mxu0 0.0
    %75 = vmatpush1.msra.mxu0 0.0
    %76 = vmatprep.subr.mxu0 0.0
    %77 = vmatpush1.msra.mxu0 0.0
    %78 = vmatprep.subr.mxu0 0.0
    %79 = vmatpush1.msra.mxu0 0.0
    %80 = vmatprep.subr.mxu0 0.0
    %81 = vmatpush1.msra.mxu0 0.0
    %82 = vmatprep.subr.mxu0 0.0
    %83 = vmatpush1.msra.mxu0 0.0
    %84 = vmatprep.subr.mxu0 0.0
    %85 = vmatpush1.msra.mxu0 0.0
    %86 = vmatprep.subr.mxu0 0.0
    %87 = vmatpush1.msra.mxu0 0.0
    %88 = vmatprep.subr.mxu0 0.0
    %89 = vmatpush1.msra.mxu0 0.0
    %90 = vmatprep.subr.mxu0 0.0
    %91 = vmatpush1.msra.mxu0 0.0
    %92 = vmatprep.subr.mxu0 0.0
    %93 = vmatpush1.msra.mxu0 0.0
    %94 = vmatprep.subr.mxu0 0.0
    %95 = vmatpush1.msra.mxu0 0.0
    %96 = vmatprep.subr.mxu0 0.0
    %97 = vmatpush1.msra.mxu0 0.0
    %98 = vmatprep.subr.mxu0 0.0
    %99 = vmatpush1.msra.mxu0 0.0
    %100 = vmatprep.subr.mxu0 0.0
    %101 = vmatpush1.msra.mxu0 0.0
    %102 = vmatprep.subr.mxu0 0.0
    %103 = vmatpush1.msra.mxu0 0.0
    %104 = vmatprep.subr.mxu0 0.0
    %105 = vmatpush1.msra.mxu0 0.0
    %106 = vmatprep.subr.mxu0 0.0
    %107 = vmatpush1.msra.mxu0 0.0
    %108 = vmatprep.subr.mxu0 0.0
    %109 = vmatpush1.msra.mxu0 0.0
    %110 = vmatprep.subr.mxu0 0.0
    %111 = vmatpush1.msra.mxu0 0.0
    %112 = vmatprep.subr.mxu0 0.0
    %113 = vmatpush1.msra.mxu0 0.0
    %114 = vmatprep.subr.mxu0 0.0
    %115 = vmatpush1.msra.mxu0 0.0
    %116 = vmatprep.subr.mxu0 0.0
    %117 = vmatpush1.msra.mxu0 0.0
    %118 = vmatprep.subr.mxu0 0.0
    %119 = vmatpush1.msra.mxu0 0.0
    %120 = vmatprep.subr.mxu0 0.0
    %121 = vmatpush1.msra.mxu0 0.0
    %122 = vmatprep.mubr.f32.mxu0 0.0
    %123 = vmatmul.mubr.f32.gmra.mrb[0].mxu0 %v53
    %v124 = vpop.f32.mrb[0].mxu0
    %v125 = vadd.f32 %v49, %v124
    %v126 = vpop.f32.mrb[0].mxu0
    %127 = vmatprep.mubr.f32.mxu0 0.0
    %128 = vmatmul.mubr.f32.gmra.mrb[0].mxu0 %v56
    %v129 = vpop.f32.mrb[0].mxu0
    %v130 = vadd.f32 %v49, %v129
    %v131 = vpop.f32.mrb[0].mxu0
    %132 = vdwg.mxu0
    %v133 = vmax.f32 %v125, 0.0
    %v134 = vmax.f32 %v130, 0.0
    %v135 = vld [vmem:[%s4] sm:$0xff]
    %v136 = vld [vmem:[%s4 + $0x8] sm:$0xff]
    %v137 = vld [vmem:[%s4 + $0x10] sm:$0xff]
    %v138 = vld [vmem:[%s4 + $0x18] sm:$0xff]
    %v139 = vld [vmem:[%s4 + $0x20] sm:$0xff]
    %v140 = vld [vmem:[%s4 + $0x28] sm:$0xff]
    %v141 = vld [vmem:[%s4 + $0x30] sm:$0xff]
    %v142 = vld [vmem:[%s4 + $0x38] sm:$0xff]
    %v143 = vld [vmem:[%s5] sm:$0x1]
    %v145 = vlaneseq
    %v146 = vshrl.u32 %v145, 7
    %v147 = vsub.s32 0, %v146
    %v148 = vrot.slane %v143, %v147
    %vm150 = vcmask 523264
    %v152 = vsel %vm150, %v133, 0
    %v155 = vsel %vm150, %v134, 0
    %157 = vmatprep.subr.mxu0 0.0
    %158 = vmatpush1.msra.mxu0 %v135
    %159 = vmatprep.subr.mxu0 0.0
    %160 = vmatpush1.msra.mxu0 %v136
    %161 = vmatprep.subr.mxu0 0.0
    %162 = vmatpush1.msra.mxu0 %v137
    %163 = vmatprep.subr.mxu0 0.0
    %164 = vmatpush1.msra.mxu0 %v138
    %165 = vmatprep.subr.mxu0 0.0
    %166 = vmatpush1.msra.mxu0 %v139
    %167 = vmatprep.subr.mxu0 0.0
    %168 = vmatpush1.msra.mxu0 %v140
    %169 = vmatprep.subr.mxu0 0.0
    %170 = vmatpush1.msra.mxu0 %v141
    %171 = vmatprep.subr.mxu0 0.0
    %172 = vmatpush1.msra.mxu0 %v142
    %173 = vmatprep.subr.mxu0 0.0
    %174 = vmatpush1.msra.mxu0 0.0
    %175 = vmatprep.subr.mxu0 0.0
    %176 = vmatpush1.msra.mxu0 0.0
    %177 = vmatprep.subr.mxu0 0.0
    %178 = vmatpush1.msra.mxu0 0.0
    %179 = vmatprep.subr.mxu0 0.0
    %180 = vmatpush1.msra.mxu0 0.0
    %181 = vmatprep.subr.mxu0 0.0
    %182 = vmatpush1.msra.mxu0 0.0
    %183 = vmatprep.subr.mxu0 0.0
    %184 = vmatpush1.msra.mxu0 0.0
    %185 = vmatprep.subr.mxu0 0.0
    %186 = vmatpush1.msra.mxu0 0.0
    %187 = vmatprep.subr.mxu0 0.0
    %188 = vmatpush1.msra.mxu0 0.0
    %189 = vmatprep.subr.mxu0 0.0
    %190 = vmatpush1.msra.mxu0 0.0
    %191 = vmatprep.subr.mxu0 0.0
    %192 = vmatpush1.msra.mxu0 0.0
    %193 = vmatprep.subr.mxu0 0.0
    %194 = vmatpush1.msra.mxu0 0.0
    %195 = vmatprep.subr.mxu0 0.0
    %196 = vmatpush1.msra.mxu0 0.0
    %197 = vmatprep.subr.mxu0 0.0
    %198 = vmatpush1.msra.mxu0 0.0
    %199 = vmatprep.subr.mxu0 0.0
    %200 = vmatpush1.msra.mxu0 0.0
    %201 = vmatprep.subr.mxu0 0.0
    %202 = vmatpush1.msra.mxu0 0.0
    %203 = vmatprep.subr.mxu0 0.0
    %204 = vmatpush1.msra.mxu0 0.0
    %205 = vmatprep.subr.mxu0 0.0
    %206 = vmatpush1.msra.mxu0 0.0
    %207 = vmatprep.subr.mxu0 0.0
    %208 = vmatpush1.msra.mxu0 0.0
    %209 = vmatprep.subr.mxu0 0.0
    %210 = vmatpush1.msra.mxu0 0.0
    %211 = vmatprep.subr.mxu0 0.0
    %212 = vmatpush1.msra.mxu0 0.0
    %213 = vmatprep.subr.mxu0 0.0
    %214 = vmatpush1.msra.mxu0 0.0
    %215 = vmatprep.subr.mxu0 0.0
    %216 = vmatpush1.msra.mxu0 0.0
    %217 = vmatprep.subr.mxu0 0.0
    %218 = vmatpush1.msra.mxu0 0.0
    %219 = vmatprep.subr.mxu0 0.0
    %220 = vmatpush1.msra.mxu0 0.0
    %221 = vmatprep.mubr.f32.mxu0 0.0
    %222 = vmatmul.mubr.f32.gmra.mrb[0].mxu0 %v152
    %v223 = vpop.f32.mrb[0].mxu0
    %v224 = vadd.f32 %v148, %v223
    %v225 = vpop.f32.mrb[0].mxu0
    %226 = vmatprep.mubr.f32.mxu0 0.0
    %227 = vmatmul.mubr.f32.gmra.mrb[0].mxu0 %v155
    %v228 = vpop.f32.mrb[0].mxu0
    %v229 = vadd.f32 %v148, %v228
    %v230 = vpop.f32.mrb[0].mxu0
    %231 = vdwg.mxu0
    %v232 = vmax.f32 %v224, 0.0
    %v233 = vmax.f32 %v229, 0.0
    %s234 = sld [smem:[#allocation2 + $0x1]]
    %v235 = vld [vmem:[%s6] sm:$0x1]
    %v237 = vlaneseq
    %v238 = vshrl.u32 %v237, 7
    %v239 = vsub.s32 0, %v238
    %v240 = vrot.slane %v235, %v239
    %v242 = vmul.f32 %v232, %v240
    %v243 = vmul.f32 %v233, %v240
    %vm244 = vcmask 261120
    %v245 = vsel %vm244, %v242, 0.0
    %246 = vadd.xlane.f32.xlu0 %v245
    %v247 = vpop.xlane.xlu0 %246
    %v248 = vsel %vm244, %v243, 0.0
    %249 = vadd.xlane.f32.xlu0 %v248
    %v250 = vpop.xlane.xlu0 %249
    %v251 = vstv %s234
    %v252 = vadd.f32 %v247, %v251
    %v253 = vadd.f32 %v250, %v251
    %s254 = sld [smem:[#allocation2]]
    %v257 = vlaneseq
    %v258 = vand.u32 %v257, 127
    %v259 = vlaneseq
    %v260 = vshrl.u32 %v259, 7
    %v261 = vsub.s32 %v258, %v260
    %v262 = vrot.slane %v252, %v261
    %v263 = vlaneseq
    %v264 = vshrl.u32 %v263, 7
    %v265 = vsub.s32 %v258, %v264
    %v266 = vrot.slane %v253, %v265
    %vm267 = vcmask 1041409
    %v268 = vsel %vm267, %v266, %v262
    %vm270 = vcmask 58368
    %v271 = vsel %vm270, %v268, -inf
    %272 = vmax.xlane.f32.xlu0 %v271
    %v273 = vpop.xlane.xlu0 %272
    %v274 = vstv %s254
    %v275 = vmax.f32 %v273, %v274
    %v277 = vlaneseq
    %v278 = vshrl.u32 %v277, 7
    %v279 = vsub.s32 0, %v278
    %v280 = vrot.slane %v275, %v279
    %v281 = vlaneseq
    %v282 = vshrl.u32 %v281, 7
    %v283 = vsub.s32 1, %v282
    %v284 = vrot.slane %v275, %v283
    %v287 = vsub.f32 %v252, %v280
    %v288 = vsub.f32 %v253, %v284
    %v289 = vmul.f32 %v287, 1.442695
    %v290 = vpow.pop %v289
    %v291 = vmul.f32 %v288, 1.442695
    %v292 = vpow.pop %v291
    %v293 = vsub.f32 %v274, %v275
    %v294 = vmul.f32 %v293, 1.442695
    %v295 = vpow.pop %v294
    %298 = vset.pattern.permute.xlu0 0
    %299 = vperm.xlu0 %298, %v290
    %v300 = vpop.permute.xlu0 %299
    %301 = vset.pattern.permute.xlu0 0
    %302 = vperm.xlu0 %301, %v292
    %v303 = vpop.permute.xlu0 %302
    %v304 = vlaneseq
    %v305 = vshrl.u32 %v304, 7
    %v306 = vsub.s32 %v258, %v305
    %v307 = vrot.slane %v300, %v306
    %v308 = vlaneseq
    %v309 = vshrl.u32 %v308, 7
    %v310 = vsub.s32 %v258, %v309
    %v311 = vrot.slane %v303, %v310
    %v312 = vsel %vm267, %v311, %v307
    %v314 = vsel %vm270, %v312, 0.0
    %315 = vadd.xlane.f32.xlu0 %v314
    %v316 = vpop.xlane.xlu0 %315
    %v317 = vadd.f32 %v316, %v295
    %v318 = vmul.f32 %v317, 1.00009
    %v319 = vrcp.pop %v318
    %v320 = vmul.f32 %v317, 1e-05
    %v321 = vadd.f32 %v295, %v320
    %v322 = vmul.f32 %v321, %v319
    %vm323 = vcmask 1024
    %324 = vst.msk [vmem:[#allocation5] sm:$0x3] %vm323, %v322
    %v326 = vlaneseq
    %v327 = vshrl.u32 %v326, 7
    %v328 = vsub.s32 0, %v327
    %v329 = vrot.slane %v320, %v328
    %v330 = vlaneseq
    %v331 = vshrl.u32 %v330, 7
    %v332 = vsub.s32 1, %v331
    %v333 = vrot.slane %v320, %v332
    %v336 = vadd.f32 %v290, %v329
    %v337 = vadd.f32 %v292, %v333
    %v339 = vlaneseq
    %v340 = vshrl.u32 %v339, 7
    %v341 = vsub.s32 0, %v340
    %v342 = vrot.slane %v319, %v341
    %v343 = vlaneseq
    %v344 = vshrl.u32 %v343, 7
    %v345 = vsub.s32 1, %v344
    %v346 = vrot.slane %v319, %v345
    %v349 = vmul.f32 %v336, %v342
    %v350 = vmul.f32 %v337, %v346
    %353 = vset.pattern.permute.xlu0 0
    %354 = vperm.xlu0 %353, %v349
    %v355 = vpop.permute.xlu0 %354
    %356 = vset.pattern.permute.xlu0 0
    %357 = vperm.xlu0 %356, %v350
    %v358 = vpop.permute.xlu0 %357
    %v359 = vadd.s32 %v258, 4294967295
    %v360 = vlaneseq
    %v361 = vshrl.u32 %v360, 7
    %v362 = vsub.s32 %v359, %v361
    %v363 = vrot.slane %v355, %v362
    %v364 = vlaneseq
    %v365 = vshrl.u32 %v364, 7
    %v366 = vsub.s32 %v359, %v365
    %v367 = vrot.slane %v358, %v366
    %v368 = vsel %vm267, %v367, %v363
    %vm370 = vcmask 66568
    %371 = vst.msk [vmem:[#allocation5] sm:$0x3] %vm370, %v368
    // Predicated region
    $region34: #{tpu_custom_call.1} parent=1 // pred_check
      _
    $region35: #{tpu_custom_call.1} parent=1 // pred_check_branch
      %373 = sbr.rel (0) target = $region37
    $region36: #{tpu_custom_call.1} parent=1 // pred_region
      %s375 = ssub.s32 32, 32
      %376 = vsyncadd [#allocation3], %s375
      %s378 = sshll.u32 [#allocation5], 4
      %s379 = int_to_ptr.vmem [resolvable:$true] %s378
      %381 = dma.vmem_to_hbm [thread:$0]  %s379, 32, %s7, [#allocation3]
    $region37: #{tpu_custom_call.1} parent=1 // pred_fallthru
      _
    // Predicated region
    $region38: #{tpu_custom_call.1} parent=1 // pred_check
      _
    $region39: #{tpu_custom_call.1} parent=1 // pred_check_branch
      %383 = sbr.rel (0) target = $region41
    $region40: #{tpu_custom_call.1} parent=1 // pred_region
      %384 = dma.done [#allocation3], 32
    $region41: #{tpu_custom_call.1} parent=1 // pred_fallthru
      _
    %385 = vsyncpa [#allocation3], 1
    %386 = vsyncpa [#allocation4], 1

</llo_original>
